<compile_context>
chip_gen: v5e
topology: v5e:2x2
jax: 0.10.0
libtpu: 0.0.40
codegen_flags: <defaults>
</compile_context>

<pallas_src>
import functools

import jax
import jax.numpy as jnp
from jax.experimental import pallas as pl
from jax.experimental.pallas import tpu as pltpu

LANES = 128  # lane width of the packed output slab (value + probs + padding)


def _round_up(n, m):
    return ((n + m - 1) // m) * m


def actor_critic_kernel(x_ref, w1_ref, b1_ref, w2_ref, b2_ref, out_ref, *, num_actions):
    # x, w1, w2 arrive as bf16; biases and accumulation are f32.
    x = x_ref[...]                                   # (TB, D)  bf16

    # ---- fused layer 1 (critic || actor): (TB, D) @ (D, 2H), f32 accumulate ----
    h = jnp.dot(x, w1_ref[...], preferred_element_type=jnp.float32) + b1_ref[...]
    h = jnp.maximum(h, 0.0).astype(jnp.bfloat16)     # bf16 feed for the head matmul

    # ---- fused heads: block-diagonal (2H, 128) weight, f32 accumulate ----
    # lane 0 = critic value, lanes 1..A = actor logits, lanes A+1..127 = 0
    y = jnp.dot(h, w2_ref[...], preferred_element_type=jnp.float32) + b2_ref[...]

    # lane masks built once at (1, LANES) and broadcast against (TB, 128)
    lane = jax.lax.broadcasted_iota(jnp.int32, (1, LANES), 1)
    is_logit = jnp.logical_and(lane >= 1, lane < 1 + num_actions)

    # numerically-stable softmax over the real logit lanes only (padding -> -inf -> exp 0)
    z = jnp.where(is_logit, y, -jnp.inf)
    m = jnp.max(z, axis=-1, keepdims=True)
    e = jnp.exp(z - m)
    denom = jnp.sum(e, axis=-1, keepdims=True)
    probs = e / denom                                # exact normalization (cheap: (TB,1) column)

    # pack lane-dense output: lane 0 = value, lanes 1..A = probs, rest = 0
    out_ref[...] = jnp.where(lane == 0, y, probs).astype(out_ref.dtype)


def pack_params(params):
    """Fuse the four Linear layers into MXU/lane-friendly slabs (done once, offline).

    Weights are stored bf16 (MXU operand dtype); biases stay f32 (added to the
    f32 accumulator, negligible bytes)."""
    cw1, cb1 = params["cw1"], params["cb1"]
    cw2, cb2 = params["cw2"], params["cb2"]
    aw1, ab1 = params["aw1"], params["ab1"]
    aw2, ab2 = params["aw2"], params["ab2"]
    D, H = cw1.shape
    A = aw2.shape[1]
    assert 1 + A <= LANES, "value + action lanes must fit one 128-lane slab"

    w1 = jnp.concatenate([cw1, aw1], axis=1).astype(jnp.bfloat16)   # (D, 2H)
    b1 = jnp.concatenate([cb1, ab1], axis=1)                        # (1, 2H) f32

    w2 = jnp.zeros((2 * H, LANES), jnp.float32)                     # block-diagonal heads
    w2 = w2.at[:H, 0].set(cw2[:, 0])                                # critic head -> lane 0
    w2 = w2.at[H:, 1:1 + A].set(aw2)                                # actor head  -> lanes 1..A
    w2 = w2.astype(jnp.bfloat16)

    b2 = jnp.zeros((1, LANES), jnp.float32)
    b2 = b2.at[0, 0].set(cb2[0, 0])
    b2 = b2.at[0, 1:1 + A].set(ab2[0])

    return dict(w1=w1, b1=b1, w2=w2, b2=b2, num_actions=A, hidden=H)


def actor_critic_forward(x, packed, *, max_tile=2048):
    """x: (B, num_inputs) f32 (or bf16). Returns (probs (B, A) f32, value (B, 1) f32)."""
    B, D = x.shape
    H = packed["hidden"]
    A = packed["num_actions"]

    # bf16 input feed halves the x HBM read and matches the MXU operand dtype.
    x = x.astype(jnp.bfloat16)

    # Batch tiling:
    #   * small B          -> single full-array block (no pipeline overhead)
    #   * B > 256          -> at least 2 tiles so "parallel" actually shards the batch
    #                         across v7x's two TensorCores; tiles capped at max_tile
    #                         (~1 MB of VMEM per bf16 tile -> huge headroom everywhere).
    if B <= 256:
        TB = B
    else:
        TB = min(max_tile, _round_up(pl.cdiv(B, 2), 8))
    grid = (pl.cdiv(B, TB),)

    kernel = functools.partial(actor_critic_kernel, num_actions=A)

    cost = pl.CostEstimate(
        flops=2 * B * (D * 2 * H + 2 * H * LANES),
        transcendentals=B * LANES,
        bytes_accessed=(2 * B * D + 2 * D * 2 * H + 4 * 2 * H
                        + 2 * 2 * H * LANES + 4 * LANES + 2 * B * LANES),
    )

    out = pl.pallas_call(
        kernel,
        out_shape=jax.ShapeDtypeStruct((B, LANES), jnp.bfloat16),
        grid_spec=pltpu.PrefetchScalarGridSpec(
            num_scalar_prefetch=0,
            grid=grid,
            in_specs=[
                # x stays (B, D); lane-sparse DMA accepted: bytes are tiny at small D.
                pl.BlockSpec((TB, D), lambda i: (i, 0)),         # x: tiled over batch
                pl.BlockSpec((D, 2 * H), lambda i: (0, 0)),      # fused layer-1 weight (resident)
                pl.BlockSpec((1, 2 * H), lambda i: (0, 0)),      # fused layer-1 bias
                pl.BlockSpec((2 * H, LANES), lambda i: (0, 0)),  # block-diagonal head weight
                pl.BlockSpec((1, LANES), lambda i: (0, 0)),      # packed head bias
            ],
            out_specs=pl.BlockSpec((TB, LANES), lambda i: (i, 0)),
        ),
        compiler_params=pltpu.CompilerParams(
            dimension_semantics=("parallel",),  # batch tiles shard across v7x's 2 TCs
        ),
        cost_estimate=cost,
    )(x, packed["w1"], packed["b1"], packed["w2"], packed["b2"])

    value = out[:, 0:1].astype(jnp.float32)
    probs = out[:, 1:1 + A].astype(jnp.float32)
    return probs, value


def init_params(key, num_inputs, num_outputs, hidden_size):
    """Deterministic init mimicking nn.Linear default (uniform +-1/sqrt(fan_in)).
    Weights stored as (in_features, out_features); biases as (1, out_features)."""
    ks = jax.random.split(key, 8)

    def lin(kw, kb, fan_in, fan_out):
        bound = 1.0 / jnp.sqrt(fan_in)
        w = jax.random.uniform(kw, (fan_in, fan_out), jnp.float32, -bound, bound)
        b = jax.random.uniform(kb, (1, fan_out), jnp.float32, -bound, bound)
        return w, b

    cw1, cb1 = lin(ks[0], ks[1], num_inputs, hidden_size)
    cw2, cb2 = lin(ks[2], ks[3], hidden_size, 1)
    aw1, ab1 = lin(ks[4], ks[5], num_inputs, hidden_size)
    aw2, ab2 = lin(ks[6], ks[7], hidden_size, num_outputs)
    return dict(cw1=cw1, cb1=cb1, cw2=cw2, cb2=cb2,
                aw1=aw1, ab1=ab1, aw2=aw2, ab2=ab2)


if __name__ == "__main__":
    key = jax.random.PRNGKey(0)
    k_x, k_p = jax.random.split(key)

    # small env-like shapes: batch of observations (B, num_inputs)
    B, num_inputs, num_outputs, hidden_size = 2, 4, 2, 128
    x = jax.random.normal(k_x, (B, num_inputs), dtype=jnp.float32)
    params = init_params(k_p, num_inputs, num_outputs, hidden_size)
    packed = pack_params(params)  # one-time fusion of the 8 Linear params (bf16 weights)

    # TODO(synk): Categorical(probs) sampling/log_prob is left to the host; the kernel
    # returns the (exactly normalized) probability tensor that parameterizes the distribution.
    probs, value = actor_critic_forward(x, packed)
    jax.block_until_ready((probs, value))

    # sanity: shapes match the PyTorch module, rows sum to ~1 (bf16 output rounding)
    assert probs.shape == (B, num_outputs)
    assert value.shape == (B, 1)
    assert bool(jnp.allclose(jnp.sum(probs, axis=1), 1.0, atol=1e-2))

    # reference check against plain-JAX f32 forward (unfused params); tolerance reflects
    # the deliberate bf16 MXU operands + bf16 output slab.
    h_c = jnp.maximum(x @ params["cw1"] + params["cb1"], 0.0)
    v_ref = h_c @ params["cw2"] + params["cb2"]
    h_a = jnp.maximum(x @ params["aw1"] + params["ab1"], 0.0)
    p_ref = jax.nn.softmax(h_a @ params["aw2"] + params["ab2"], axis=1)
    assert bool(jnp.allclose(value, v_ref, atol=3e-2))
    assert bool(jnp.allclose(probs, p_ref, atol=3e-2))

    print("KERNEL_OK")
</pallas_src>

<mosaic_0001>
module attributes {stable_mosaic.version = 11 : i64} {
  func.func @actor_critic_kernel(%arg0: i32, %arg1: memref<2x4xbf16, #tpu.memory_space<vmem>>, %arg2: memref<4x256xbf16, #tpu.memory_space<vmem>>, %arg3: memref<1x256xf32, #tpu.memory_space<vmem>>, %arg4: memref<256x128xbf16, #tpu.memory_space<vmem>>, %arg5: memref<1x128xf32, #tpu.memory_space<vmem>>, %arg6: memref<2x128xbf16, #tpu.memory_space<vmem>>) attributes {dimension_semantics = [#tpu.dimension_semantics<parallel>], iteration_bounds = array<i64: 1>, scalar_prefetch = 0 : i64, scratch_operands = 0 : i64, tpu.core_type = #tpu.core_type<tc>, window_params = [{transform_indices = @transform_0, window_bounds = array<i64: 2, 4>}, {pipeline_mode = #tpu.pipeline_mode<synchronous>, transform_indices = @transform_1, window_bounds = array<i64: 4, 256>}, {pipeline_mode = #tpu.pipeline_mode<synchronous>, transform_indices = @transform_2, window_bounds = array<i64: 1, 256>}, {pipeline_mode = #tpu.pipeline_mode<synchronous>, transform_indices = @transform_3, window_bounds = array<i64: 256, 128>}, {pipeline_mode = #tpu.pipeline_mode<synchronous>, transform_indices = @transform_4, window_bounds = array<i64: 1, 128>}, {transform_indices = @transform_5, window_bounds = array<i64: 2, 128>}]} {
    %c0 = arith.constant 0 : index
    %c0_0 = arith.constant 0 : index
    %0 = vector.load %arg1[%c0, %c0_0] : memref<2x4xbf16, #tpu.memory_space<vmem>>, vector<2x4xbf16>
    %c0_1 = arith.constant 0 : index
    %c0_2 = arith.constant 0 : index
    %1 = vector.load %arg2[%c0_1, %c0_2] : memref<4x256xbf16, #tpu.memory_space<vmem>>, vector<4x256xbf16>
    %cst = arith.constant dense<0.000000e+00> : vector<2x256xf32>
    %2 = tpu.matmul %0, %1, %cst {dimension_numbers = #tpu.dot_dimension_numbers<[1], [0], [0], [1], [0, 0, 1, 1], [], []>} : vector<2x4xbf16>, vector<4x256xbf16>, vector<2x256xf32> -> vector<2x256xf32>
    %c0_3 = arith.constant 0 : index
    %c0_4 = arith.constant 0 : index
    %3 = vector.load %arg3[%c0_3, %c0_4] : memref<1x256xf32, #tpu.memory_space<vmem>>, vector<1x256xf32>
    %4 = vector.broadcast %3 : vector<1x256xf32> to vector<2x256xf32>
    %5 = arith.addf %2, %4 : vector<2x256xf32>
    %cst_5 = arith.constant 0.000000e+00 : f32
    %6 = vector.broadcast %cst_5 : f32 to vector<2x256xf32>
    %7 = arith.maximumf %5, %6 : vector<2x256xf32>
    %8 = arith.truncf %7 : vector<2x256xf32> to vector<2x256xbf16>
    %c0_6 = arith.constant 0 : index
    %c0_7 = arith.constant 0 : index
    %9 = vector.load %arg4[%c0_6, %c0_7] : memref<256x128xbf16, #tpu.memory_space<vmem>>, vector<256x128xbf16>
    %cst_8 = arith.constant dense<0.000000e+00> : vector<2x128xf32>
    %10 = tpu.matmul %8, %9, %cst_8 {dimension_numbers = #tpu.dot_dimension_numbers<[1], [0], [0], [1], [0, 0, 1, 1], [], []>} : vector<2x256xbf16>, vector<256x128xbf16>, vector<2x128xf32> -> vector<2x128xf32>
    %c0_9 = arith.constant 0 : index
    %c0_10 = arith.constant 0 : index
    %11 = vector.load %arg5[%c0_9, %c0_10] : memref<1x128xf32, #tpu.memory_space<vmem>>, vector<1x128xf32>
    %12 = vector.broadcast %11 : vector<1x128xf32> to vector<2x128xf32>
    %13 = arith.addf %10, %12 : vector<2x128xf32>
    %14 = tpu.iota {dimensions = array<i32: 1>} : vector<1x128xi32>
    %c1_i32 = arith.constant 1 : i32
    %15 = vector.broadcast %c1_i32 : i32 to vector<1x128xi32>
    %16 = arith.cmpi sge, %14, %15 : vector<1x128xi32>
    %c3_i32 = arith.constant 3 : i32
    %17 = vector.broadcast %c3_i32 : i32 to vector<1x128xi32>
    %18 = arith.cmpi slt, %14, %17 : vector<1x128xi32>
    %19 = arith.andi %16, %18 : vector<1x128xi1>
    %cst_11 = arith.constant 0xFF800000 : f32
    %20 = vector.shape_cast %19 : vector<1x128xi1> to vector<1x128xi1>
    %21 = vector.broadcast %20 : vector<1x128xi1> to vector<2x128xi1>
    %22 = vector.broadcast %cst_11 : f32 to vector<2x128xf32>
    %23 = arith.select %21, %13, %22 : vector<2x128xi1>, vector<2x128xf32>
    %cst_12 = arith.constant dense<0xFF800000> : vector<2xf32>
    %24 = vector.multi_reduction <maximumf>, %23, %cst_12 [1] : vector<2x128xf32> to vector<2xf32>
    %25 = vector.shape_cast %24 : vector<2xf32> to vector<2x1xf32>
    %26 = vector.broadcast %25 : vector<2x1xf32> to vector<2x128xf32>
    %27 = arith.subf %23, %26 : vector<2x128xf32>
    %28 = math.exp %27 : vector<2x128xf32>
    %cst_13 = arith.constant dense<0.000000e+00> : vector<2xf32>
    %29 = vector.multi_reduction <add>, %28, %cst_13 [1] : vector<2x128xf32> to vector<2xf32>
    %30 = vector.shape_cast %29 : vector<2xf32> to vector<2x1xf32>
    %31 = vector.broadcast %30 : vector<2x1xf32> to vector<2x128xf32>
    %32 = arith.divf %28, %31 : vector<2x128xf32>
    %c0_i32 = arith.constant 0 : i32
    %33 = vector.broadcast %c0_i32 : i32 to vector<1x128xi32>
    %34 = arith.cmpi eq, %14, %33 : vector<1x128xi32>
    %35 = vector.shape_cast %34 : vector<1x128xi1> to vector<1x128xi1>
    %36 = vector.broadcast %35 : vector<1x128xi1> to vector<2x128xi1>
    %37 = arith.select %36, %13, %32 : vector<2x128xi1>, vector<2x128xf32>
    %38 = arith.truncf %37 : vector<2x128xf32> to vector<2x128xbf16>
    %c0_14 = arith.constant 0 : index
    %c0_15 = arith.constant 0 : index
    %39 = vector.load %arg6[%c0_14, %c0_15] : memref<2x128xbf16, #tpu.memory_space<vmem>>, vector<2x128xbf16>
    tpu.vector_store %arg6[%c0_14, %c0_15], %38 {strides = array<i32>} : memref<2x128xbf16, #tpu.memory_space<vmem>>, vector<2x128xbf16>,
    return
  }
  func.func @transform_0(%arg0: i32) -> (i32, i32) {
    %c0_i32 = arith.constant 0 : i32
    %c0_i32_0 = arith.constant 0 : i32
    return %arg0, %c0_i32 : i32, i32
  }
  func.func @transform_1(%arg0: i32) -> (i32, i32) {
    %c0_i32 = arith.constant 0 : i32
    %c0_i32_0 = arith.constant 0 : i32
    %c0_i32_1 = arith.constant 0 : i32
    return %c0_i32, %c0_i32_0 : i32, i32
  }
  func.func @transform_2(%arg0: i32) -> (i32, i32) {
    %c0_i32 = arith.constant 0 : i32
    %c0_i32_0 = arith.constant 0 : i32
    %c0_i32_1 = arith.constant 0 : i32
    return %c0_i32, %c0_i32_0 : i32, i32
  }
  func.func @transform_3(%arg0: i32) -> (i32, i32) {
    %c0_i32 = arith.constant 0 : i32
    %c0_i32_0 = arith.constant 0 : i32
    %c0_i32_1 = arith.constant 0 : i32
    return %c0_i32, %c0_i32_0 : i32, i32
  }
  func.func @transform_4(%arg0: i32) -> (i32, i32) {
    %c0_i32 = arith.constant 0 : i32
    %c0_i32_0 = arith.constant 0 : i32
    %c0_i32_1 = arith.constant 0 : i32
    return %c0_i32, %c0_i32_0 : i32, i32
  }
  func.func @transform_5(%arg0: i32) -> (i32, i32) {
    %c0_i32 = arith.constant 0 : i32
    %c0_i32_0 = arith.constant 0 : i32
    return %arg0, %c0_i32 : i32, i32
  }
}

</mosaic_0001>

<llo_original>
// kernel: tpu_custom_call.1
$region0: #{tpu_custom_call.1}
  #allocation0 [shape = 'u32[]', space=smem, size = 0x4, offset = 0x4, fixed_abs, tag = 'smem constant byte address 0x4 - core index']
  #allocation1 [shape = 'u32[72,128]{1,0:T(1,128)}', space=vmem, size = 0x9000, scoped, tag = 'internal scratch']
  %s0 = inlined_call_operand.hbm [shape: bf16[2,4], index: 0, kind: input, shape index: {}]
  %s1 = inlined_call_operand.hbm [shape: bf16[4,256], index: 1, kind: input, shape index: {}]
  %s2 = inlined_call_operand.hbm [shape: f32[1,256], index: 2, kind: input, shape index: {}]
  %s3 = inlined_call_operand.hbm [shape: bf16[256,128], index: 3, kind: input, shape index: {}]
  %s4 = inlined_call_operand.vmem [shape: f32[1,128], index: 4, kind: input, shape index: {}]
  %s5 = inlined_call_operand.hbm [shape: bf16[2,128], index: 5, kind: output, shape index: {}]
  %s6 = sld [smem:[#allocation0]]
  $region46: #{tpu_custom_call.1} parent=0
    _
  %s8 = ssub.s32 1, %s6
  %s9 = scalar_select 0, %s8, %s6
  $region1: #{tpu_custom_call.1} parent=0
    #allocation2 [shape = 'u8[512]{0}', space=vmem, size = 0x400, scoped, tag = 'input window, operand 0, single buffered']
    #allocation3 [shape = 's32[1]{0}', space=sflag, size = 0x4, scoped, tag = 'scoped memory for tpu_custom_call.1']
    #allocation4 [shape = 's32[1]{0}', space=sflag, size = 0x4, scoped, tag = 'scoped memory for tpu_custom_call.1']
    #allocation5 [shape = 'u8[2048]{0}', space=vmem, size = 0x800, scoped, tag = 'input window, operand 1, single buffered']
    #allocation6 [shape = 's32[1]{0}', space=sflag, size = 0x4, scoped, tag = 'scoped memory for tpu_custom_call.1']
    #allocation7 [shape = 'u8[1024]{0}', space=vmem, size = 0x400, scoped, tag = 'input window, operand 2, single buffered']
    #allocation8 [shape = 'u8[65536]{0}', space=vmem, size = 0x10000, scoped, tag = 'input window, operand 3, single buffered']
    #allocation9 [shape = 's32[1]{0}', space=sflag, size = 0x4, scoped, tag = 'scoped memory for tpu_custom_call.1']
    #allocation10 [shape = 'u8[512]{0}', space=vmem, size = 0x400, scoped, tag = 'output window, operand 0, single buffered']
    %10 = vsyncpa [#allocation3], 0
    %11 = vsyncpa [#allocation6], 0
    %12 = vsyncpa [#allocation9], 0
    %13 = vsyncpa [#allocation4], 0
    // Predicated region
    $region2: #{tpu_custom_call.1} parent=1 // pred_check
      _
    $region3: #{tpu_custom_call.1} parent=1 // pred_check_branch
      %15 = sbr.rel (0) target = $region5
    $region4: #{tpu_custom_call.1} parent=1 // pred_region
      %17 = vsyncadd [#allocation3], 0
      %s19 = sshll.u32 %s0, 4
      %s20 = int_to_ptr.hbm [resolvable:$true] %s19
      %s21 = sshll.u32 [#allocation2], 4
      %s22 = int_to_ptr.vmem [resolvable:$true] %s21
      %24 = dma.hbm_to_vmem [thread:$0]  %s20, 16, %s22, [#allocation3]
    $region5: #{tpu_custom_call.1} parent=1 // pred_fallthru
      _
    // Predicated region
    $region6: #{tpu_custom_call.1} parent=1 // pred_check
      _
    $region7: #{tpu_custom_call.1} parent=1 // pred_check_branch
      %26 = sbr.rel (0) target = $region9
    $region8: #{tpu_custom_call.1} parent=1 // pred_region
      %28 = vsyncadd [#allocation6], 0
      %s30 = sshll.u32 %s1, 4
      %s31 = int_to_ptr.hbm [resolvable:$true] %s30
      %s32 = sshll.u32 [#allocation5], 4
      %s33 = int_to_ptr.vmem [resolvable:$true] %s32
      %35 = dma.hbm_to_vmem [thread:$0]  %s31, 64, %s33, [#allocation6]
    $region9: #{tpu_custom_call.1} parent=1 // pred_fallthru
      _
    // Predicated region
    $region10: #{tpu_custom_call.1} parent=1 // pred_check
      _
    $region11: #{tpu_custom_call.1} parent=1 // pred_check_branch
      %37 = sbr.rel (0) target = $region13
    $region12: #{tpu_custom_call.1} parent=1 // pred_region
      %39 = vsyncadd [#allocation6], 0
      %s41 = sshll.u32 %s2, 4
      %s42 = int_to_ptr.hbm [resolvable:$true] %s41
      %s43 = sshll.u32 [#allocation7], 4
      %s44 = int_to_ptr.vmem [resolvable:$true] %s43
      %46 = dma.hbm_to_vmem [thread:$0]  %s42, 32, %s44, [#allocation6]
    $region13: #{tpu_custom_call.1} parent=1 // pred_fallthru
      _
    // Predicated region
    $region14: #{tpu_custom_call.1} parent=1 // pred_check
      _
    $region15: #{tpu_custom_call.1} parent=1 // pred_check_branch
      %48 = sbr.rel (0) target = $region17
    $region16: #{tpu_custom_call.1} parent=1 // pred_region
      %50 = vsyncadd [#allocation9], 0
      %s51 = sshll.u32 %s3, 4
      %s52 = int_to_ptr.hbm [resolvable:$true] %s51
      %s53 = sshll.u32 [#allocation8], 4
      %s54 = int_to_ptr.vmem [resolvable:$true] %s53
      %59 = dma.hbm_to_vmem [thread:$0]  %s52, 2048, %s54, [#allocation9], 64, 64, 4
    $region17: #{tpu_custom_call.1} parent=1 // pred_fallthru
      _
    // Predicated region
    $region18: #{tpu_custom_call.1} parent=1 // pred_check
      _
    $region19: #{tpu_custom_call.1} parent=1 // pred_check_branch
      %61 = sbr.rel (0) target = $region21
    $region20: #{tpu_custom_call.1} parent=1 // pred_region
      _
    $region21: #{tpu_custom_call.1} parent=1 // pred_fallthru
      _
    // Predicated region
    $region22: #{tpu_custom_call.1} parent=1 // pred_check
      _
    $region23: #{tpu_custom_call.1} parent=1 // pred_check_branch
      %63 = sbr.rel (0) target = $region25
    $region24: #{tpu_custom_call.1} parent=1 // pred_region
      %65 = dma.done [#allocation3], 16
    $region25: #{tpu_custom_call.1} parent=1 // pred_fallthru
      _
    // Predicated region
    $region26: #{tpu_custom_call.1} parent=1 // pred_check
      _
    $region27: #{tpu_custom_call.1} parent=1 // pred_check_branch
      %67 = sbr.rel (0) target = $region29
    $region28: #{tpu_custom_call.1} parent=1 // pred_region
      %69 = dma.done [#allocation6], 64
    $region29: #{tpu_custom_call.1} parent=1 // pred_fallthru
      _
    // Predicated region
    $region30: #{tpu_custom_call.1} parent=1 // pred_check
      _
    $region31: #{tpu_custom_call.1} parent=1 // pred_check_branch
      %71 = sbr.rel (0) target = $region33
    $region32: #{tpu_custom_call.1} parent=1 // pred_region
      %73 = dma.done [#allocation6], 32
    $region33: #{tpu_custom_call.1} parent=1 // pred_fallthru
      _
    // Predicated region
    $region34: #{tpu_custom_call.1} parent=1 // pred_check
      _
    $region35: #{tpu_custom_call.1} parent=1 // pred_check_branch
      %75 = sbr.rel (0) target = $region37
    $region36: #{tpu_custom_call.1} parent=1 // pred_region
      %77 = dma.done [#allocation9], 2048
    $region37: #{tpu_custom_call.1} parent=1 // pred_fallthru
      _
    %v79 = vld [vmem:[#allocation2] sm:$0x1]
    %v80 = vld [vmem:[#allocation5] sm:$0xf]
    %v81 = vld [vmem:[#allocation7] sm:$0x3]
    %v83 = vperm.slane %v81, 0
    %v84 = vperm.slane %v81, 1
    %88 = vst [vmem:[#allocation1] ss:$4 sm:$0xff] %v80
    %v89 = vld.sshfl [vmem:[#allocation1] sm:$0xff pattern:$0x73625140]
    %v90 = vld.sshfl [vmem:[#allocation1 + $0x8] sm:$0xff pattern:$0x73625140]
    %vm91 = vcmask 31744
    %v93 = vsel %vm91, %v79, 0
    %vm95 = vcmask 1041408
    %v96 = vsel %vm95, %v89, 0
    %v98 = vsel %vm95, %v90, 0
    %100 = vmatpush.bf16.msra.mxu0 0
    %101 = vmatpush.bf16.msra.mxu0 0
    %102 = vmatpush.bf16.msra.mxu0 0
    %103 = vmatpush.bf16.msra.mxu0 0
    %104 = vmatpush.bf16.msra.mxu0 0
    %105 = vmatpush.bf16.msra.mxu0 0
    %106 = vmatpush.bf16.msra.mxu0 0
    %107 = vmatpush.bf16.msra.mxu0 %v96
    %108 = vmatmul.bf16.gmra.mxu0 %v93
    %v109 = vpop.f32.mrf.mxu0
    %v110 = vadd.f32 %v83, %v109
    %v111 = vpop.f32.mrf.mxu0
    %112 = vdwg.mxu0
    %113 = vmatpush.bf16.msra.mxu0 0
    %114 = vmatpush.bf16.msra.mxu0 0
    %115 = vmatpush.bf16.msra.mxu0 0
    %116 = vmatpush.bf16.msra.mxu0 0
    %117 = vmatpush.bf16.msra.mxu0 0
    %118 = vmatpush.bf16.msra.mxu0 0
    %119 = vmatpush.bf16.msra.mxu0 0
    %120 = vmatpush.bf16.msra.mxu0 %v98
    %121 = vmatmul.bf16.gmra.mxu0 %v93
    %v122 = vpop.f32.mrf.mxu0
    %v123 = vadd.f32 %v84, %v122
    %v124 = vpop.f32.mrf.mxu0
    %125 = vdwg.mxu0
    %v126 = vmax.f32 %v110, 0.0
    %v127 = vmax.f32 %v123, 0.0
    %v128 = vpack.c.bf16 %v126, %v126
    %v129 = vpack.c.bf16 %v127, %v127
    %v130 = vld [vmem:[#allocation8] sm:$0xf]
    %v131 = vld [vmem:[#allocation8 + $0x4] sm:$0xf]
    %v132 = vld [vmem:[#allocation8 + $0x8] sm:$0xf]
    %v133 = vld [vmem:[#allocation8 + $0xc] sm:$0xf]
    %v134 = vld [vmem:[#allocation8 + $0x10] sm:$0xf]
    %v135 = vld [vmem:[#allocation8 + $0x14] sm:$0xf]
    %v136 = vld [vmem:[#allocation8 + $0x18] sm:$0xf]
    %v137 = vld [vmem:[#allocation8 + $0x1c] sm:$0xf]
    %v138 = vld [vmem:[#allocation8 + $0x20] sm:$0xf]
    %v139 = vld [vmem:[#allocation8 + $0x24] sm:$0xf]
    %v140 = vld [vmem:[#allocation8 + $0x28] sm:$0xf]
    %v141 = vld [vmem:[#allocation8 + $0x2c] sm:$0xf]
    %v142 = vld [vmem:[#allocation8 + $0x30] sm:$0xf]
    %v143 = vld [vmem:[#allocation8 + $0x34] sm:$0xf]
    %v144 = vld [vmem:[#allocation8 + $0x38] sm:$0xf]
    %v145 = vld [vmem:[#allocation8 + $0x3c] sm:$0xf]
    %v146 = vld [vmem:[#allocation8 + $0x40] sm:$0xf]
    %v147 = vld [vmem:[#allocation8 + $0x44] sm:$0xf]
    %v148 = vld [vmem:[#allocation8 + $0x48] sm:$0xf]
    %v149 = vld [vmem:[#allocation8 + $0x4c] sm:$0xf]
    %v150 = vld [vmem:[#allocation8 + $0x50] sm:$0xf]
    %v151 = vld [vmem:[#allocation8 + $0x54] sm:$0xf]
    %v152 = vld [vmem:[#allocation8 + $0x58] sm:$0xf]
    %v153 = vld [vmem:[#allocation8 + $0x5c] sm:$0xf]
    %v154 = vld [vmem:[#allocation8 + $0x60] sm:$0xf]
    %v155 = vld [vmem:[#allocation8 + $0x64] sm:$0xf]
    %v156 = vld [vmem:[#allocation8 + $0x68] sm:$0xf]
    %v157 = vld [vmem:[#allocation8 + $0x6c] sm:$0xf]
    %v158 = vld [vmem:[#allocation8 + $0x70] sm:$0xf]
    %v159 = vld [vmem:[#allocation8 + $0x74] sm:$0xf]
    %v160 = vld [vmem:[#allocation8 + $0x78] sm:$0xf]
    %v161 = vld [vmem:[#allocation8 + $0x7c] sm:$0xf]
    %v162 = vld [vmem:[%s4] sm:$0x1]
    %v164 = vperm.slane %v162, 0
    %v198 = vunpack.c.l.b16 %v130
    %v199 = vunpack.c.l.b16 %v131
    %v200 = vunpack.c.l.b16 %v132
    %v201 = vunpack.c.l.b16 %v133
    %v202 = vunpack.c.l.b16 %v134
    %v203 = vunpack.c.l.b16 %v135
    %v204 = vunpack.c.l.b16 %v136
    %v205 = vunpack.c.l.b16 %v137
    %v206 = vunpack.c.l.b16 %v138
    %v207 = vunpack.c.l.b16 %v139
    %v208 = vunpack.c.l.b16 %v140
    %v209 = vunpack.c.l.b16 %v141
    %v210 = vunpack.c.l.b16 %v142
    %v211 = vunpack.c.l.b16 %v143
    %v212 = vunpack.c.l.b16 %v144
    %v213 = vunpack.c.l.b16 %v145
    %v214 = vunpack.c.l.b16 %v146
    %v215 = vunpack.c.l.b16 %v147
    %v216 = vunpack.c.l.b16 %v148
    %v217 = vunpack.c.l.b16 %v149
    %v218 = vunpack.c.l.b16 %v150
    %v219 = vunpack.c.l.b16 %v151
    %v220 = vunpack.c.l.b16 %v152
    %v221 = vunpack.c.l.b16 %v153
    %v222 = vunpack.c.l.b16 %v154
    %v223 = vunpack.c.l.b16 %v155
    %v224 = vunpack.c.l.b16 %v156
    %v225 = vunpack.c.l.b16 %v157
    %v226 = vunpack.c.l.b16 %v158
    %v227 = vunpack.c.l.b16 %v159
    %v228 = vunpack.c.l.b16 %v160
    %v229 = vunpack.c.l.b16 %v161
    %v230 = vpack.c.b16 %v199, %v198
    %v231 = vpack.c.b16 %v201, %v200
    %v232 = vpack.c.b16 %v203, %v202
    %v233 = vpack.c.b16 %v205, %v204
    %v234 = vpack.c.b16 %v207, %v206
    %v235 = vpack.c.b16 %v209, %v208
    %v236 = vpack.c.b16 %v211, %v210
    %v237 = vpack.c.b16 %v213, %v212
    %v238 = vpack.c.b16 %v215, %v214
    %v239 = vpack.c.b16 %v217, %v216
    %v240 = vpack.c.b16 %v219, %v218
    %v241 = vpack.c.b16 %v221, %v220
    %v242 = vpack.c.b16 %v223, %v222
    %v243 = vpack.c.b16 %v225, %v224
    %v244 = vpack.c.b16 %v227, %v226
    %v245 = vpack.c.b16 %v229, %v228
    %262 = vmatpush.bf16.msra.mxu0 %v237
    %263 = vmatpush.bf16.msra.mxu0 %v236
    %264 = vmatpush.bf16.msra.mxu0 %v235
    %265 = vmatpush.bf16.msra.mxu0 %v234
    %266 = vmatpush.bf16.msra.mxu0 %v233
    %267 = vmatpush.bf16.msra.mxu0 %v232
    %268 = vmatpush.bf16.msra.mxu0 %v231
    %269 = vmatpush.bf16.msra.mxu0 %v230
    %270 = vmatmul.bf16.gmra.mxu0 %v128
    %v271 = vpop.f32.mrf.mxu0
    %v272 = vadd.f32 %v164, %v271
    %v273 = vpop.f32.mrf.mxu0
    %274 = vdwg.mxu0
    %275 = vmatpush.bf16.msra.mxu0 %v245
    %276 = vmatpush.bf16.msra.mxu0 %v244
    %277 = vmatpush.bf16.msra.mxu0 %v243
    %278 = vmatpush.bf16.msra.mxu0 %v242
    %279 = vmatpush.bf16.msra.mxu0 %v241
    %280 = vmatpush.bf16.msra.mxu0 %v240
    %281 = vmatpush.bf16.msra.mxu0 %v239
    %282 = vmatpush.bf16.msra.mxu0 %v238
    %283 = vmatmul.bf16.gmra.mxu0 %v129
    %v284 = vpop.f32.mrf.mxu0
    %v285 = vadd.f32 %v272, %v284
    %v286 = vpop.f32.mrf.mxu0
    %287 = vdwg.mxu0
    %v288 = vlaneseq
    %v289 = vand.u32 %v288, 127
    %vm290 = vcmp.ge.s32.totalorder %v289, 1
    %vm291 = vcmp.lt.s32.totalorder %v289, 3
    %vm292 = vmand %vm290, %vm291
    %v293 = vsel %vm292, 1, 0
    %vm294 = vcmp.eq.s32.totalorder %v293, 1
    %v295 = vsel %vm294, %v285, -inf
    %v296 = vsel %vm95, %v295, -inf
    %297 = vmax.xlane.f32.xlu0 %v296
    %v298 = vpop.xlane.xlu0 %297
    %v299 = vsub.f32 %v295, %v298
    %v300 = vmul.f32 %v299, 1.442695
    %v301 = vpow.pop %v300
    %v302 = vsel %vm95, %v301, 0.0
    %303 = vadd.xlane.f32.xlu0 %v302
    %v304 = vpop.xlane.xlu0 %303
    %v305 = vrcp.pop %v304
    %v306 = vmul.f32 %v304, %v305
    %v307 = vsub.f32 1.0, %v306
    %v308 = vmul.f32 %v305, %v307
    %v309 = vadd.f32 %v305, %v308
    %vm310 = vweird.f32 %v304
    %vm311 = vweird.f32 %v305
    %vm312 = vmor %vm310, %vm311
    %v313 = vsel %vm312, %v305, %v309
    %v314 = vand.u32 2147483647, %v304
    %vm315 = vcmp.eq.f32.partialorder %v314, 8.507059e+37
    %v316 = vand.u32 %v304, 2147483648
    %v317 = vor.u32 1.1754944e-38, %v316
    %v318 = vsel %vm315, %v317, %v313
    %v319 = vmul.f32 %v301, %v318
    %vm320 = vcmp.eq.s32.totalorder %v289, 0
    %v321 = vsel %vm320, 1, 0
    %vm322 = vcmp.eq.s32.totalorder %v321, 1
    %v323 = vsel %vm322, %v285, %v319
    %v324 = vpack.c.bf16 %v323, %v323
    %325 = vst [vmem:[#allocation10] sm:$0x1] %v324
    // Predicated region
    $region38: #{tpu_custom_call.1} parent=1 // pred_check
      _
    $region39: #{tpu_custom_call.1} parent=1 // pred_check_branch
      %327 = sbr.rel (0) target = $region41
    $region40: #{tpu_custom_call.1} parent=1 // pred_region
      %329 = vsyncadd [#allocation4], 0
      %s331 = sshll.u32 [#allocation10], 4
      %s332 = int_to_ptr.vmem [resolvable:$true] %s331
      %s333 = sshll.u32 %s5, 4
      %s334 = int_to_ptr.hbm [resolvable:$true] %s333
      %336 = dma.vmem_to_hbm [thread:$0]  %s332, 16, %s334, [#allocation4]
    $region41: #{tpu_custom_call.1} parent=1 // pred_fallthru
      _
    // Predicated region
    $region42: #{tpu_custom_call.1} parent=1 // pred_check
      _
    $region43: #{tpu_custom_call.1} parent=1 // pred_check_branch
      %338 = sbr.rel (0) target = $region45
    $region44: #{tpu_custom_call.1} parent=1 // pred_region
      %340 = dma.done [#allocation4], 16
    $region45: #{tpu_custom_call.1} parent=1 // pred_fallthru
      _
    %341 = vsyncpa [#allocation3], 1
    %342 = vsyncpa [#allocation6], 1
    %343 = vsyncpa [#allocation9], 1
    %344 = vsyncpa [#allocation4], 1

</llo_original>
